<compile_context>
chip_gen: v7x
topology: tpu7x:2x2x1
jax: 0.10.0
libtpu: 0.0.40
codegen_flags: <defaults>
</compile_context>

<pallas_src>
import jax
import jax.numpy as jnp
from jax.experimental import pallas as pl
from jax.experimental.pallas import tpu as pltpu


def _round_up(x, m):
    return (x + m - 1) // m * m


# ---------------------------------------------------------------------------
# Kernel: one (tm, tn) output tile per grid point.
#   x1_ref : (tm, in_dim)
#   x2_ref : (tm, in_dim)
#   w1_ref : (in_dim, 2*tn)   packed [ W1_j | Wg1_j ] for this hidden tile
#   w2_ref : (in_dim, 2*tn)   packed [ W2_j | Wg2_j ] for this hidden tile
#   b_ref  : (1, 3*tn)        packed [ b1_j | b2_j | bg_j ]
#   o_ref  : (tm, tn)
# ---------------------------------------------------------------------------
def gmu_kernel(x1_ref, x2_ref, w1_ref, w2_ref, b_ref, o_ref):
    tn = o_ref.shape[-1]

    # Two dense MXU passes, f32 accumulation.
    acc1 = jnp.dot(x1_ref[...], w1_ref[...], preferred_element_type=jnp.float32)
    acc2 = jnp.dot(x2_ref[...], w2_ref[...], preferred_element_type=jnp.float32)

    h1 = jnp.tanh(acc1[:, 0:tn] + b_ref[:, 0:tn])          # tanh(x1 @ W1 + b1)
    h2 = jnp.tanh(acc2[:, 0:tn] + b_ref[:, tn:2 * tn])     # tanh(x2 @ W2 + b2)

    # sigmoid(z) == 0.5*tanh(0.5*z) + 0.5  (exact; single EUP push).
    z = acc1[:, tn:2 * tn] + acc2[:, tn:2 * tn] + b_ref[:, 2 * tn:3 * tn]
    g = 0.5 * jnp.tanh(0.5 * z) + 0.5

    # g*h1 + (1-g)*h2 with one fewer multiply.
    o_ref[...] = h2 + g * (h1 - h2)


# ---------------------------------------------------------------------------
# One-time packing of the split GMU parameters (host/wrapper side).
# Per hidden tile j (tn lanes each):
#   w1_pack columns: [ W1_j | Wg1_j ],  w2_pack columns: [ W2_j | Wg2_j ]
#   b_pack  columns: [ b1_j | b2_j | bg_j ]
# ---------------------------------------------------------------------------
def pack_params(params, *, tn=128, matmul_dtype=jnp.float32):
    in_dim, hidden = params["w1"].shape
    h_pad = _round_up(hidden, tn)
    n_j = h_pad // tn

    def tiles(a):  # (r, hidden) -> (r, n_j, 1, tn)
        r = a.shape[0]
        a = jnp.pad(a, ((0, 0), (0, h_pad - hidden)))
        return a.reshape(r, n_j, 1, tn)

    w1_pack = jnp.concatenate([tiles(params["w1"]), tiles(params["wg1"])],
                              axis=2).reshape(in_dim, n_j * 2 * tn)
    w2_pack = jnp.concatenate([tiles(params["w2"]), tiles(params["wg2"])],
                              axis=2).reshape(in_dim, n_j * 2 * tn)
    b_pack = jnp.concatenate([tiles(params["b1"]), tiles(params["b2"]),
                              tiles(params["bg"])],
                             axis=2).reshape(1, n_j * 3 * tn)

    return {
        "w1_pack": w1_pack.astype(matmul_dtype),  # bf16 on v6e/v7x if desired
        "w2_pack": w2_pack.astype(matmul_dtype),
        "b_pack": b_pack.astype(jnp.float32),      # bias stays f32
        "in_dim": in_dim,
        "hidden": hidden,
        "h_pad": h_pad,
        "tn": tn,
    }


# ---------------------------------------------------------------------------
# Forward wrapper: builds grid / BlockSpecs and calls the kernel.
# Grid = (hidden_tiles, batch_tiles): batch is the inner (fastest) axis, so the
# weight/bias block index is constant across consecutive steps and each weight
# tile is fetched from HBM exactly once and stays VMEM-resident.
# ---------------------------------------------------------------------------
def gmu_forward(x1, x2, packed, *, tm=512):
    B, in_dim = x1.shape
    assert in_dim == packed["in_dim"] and x2.shape == x1.shape
    hidden, h_pad, tn = packed["hidden"], packed["h_pad"], packed["tn"]
    n_j = h_pad // tn

    tm = min(tm, _round_up(B, 8))
    b_pad = _round_up(B, tm)
    n_i = b_pad // tm

    mat_dtype = packed["w1_pack"].dtype
    x1 = x1.astype(mat_dtype)
    x2 = x2.astype(mat_dtype)
    if b_pad != B:
        pad = ((0, b_pad - B), (0, 0))
        x1 = jnp.pad(x1, pad)
        x2 = jnp.pad(x2, pad)

    grid = (n_j, n_i)

    itemsize = jnp.dtype(mat_dtype).itemsize
    flops = 2 * 2 * b_pad * in_dim * (2 * h_pad)        # two dense dots
    transcendentals = 3 * b_pad * h_pad                  # 3 tanh per output elem
    bytes_accessed = (
        2 * b_pad * in_dim * itemsize * n_j              # x1/x2 re-read per j
        + 2 * in_dim * 2 * h_pad * itemsize              # weight packs, read once
        + 3 * h_pad * 4                                  # bias
        + b_pad * h_pad * 4                              # output
    )

    out = pl.pallas_call(
        gmu_kernel,
        out_shape=jax.ShapeDtypeStruct((b_pad, h_pad), jnp.float32),
        grid=grid,
        in_specs=[
            # activations stream over the inner batch axis
            pl.BlockSpec((tm, in_dim), lambda j, i: (i, 0)),
            pl.BlockSpec((tm, in_dim), lambda j, i: (i, 0)),
            # weights / bias keyed on the outer hidden axis -> constant over i
            pl.BlockSpec((in_dim, 2 * tn), lambda j, i: (0, j)),
            pl.BlockSpec((in_dim, 2 * tn), lambda j, i: (0, j)),
            pl.BlockSpec((1, 3 * tn), lambda j, i: (0, j)),
        ],
        out_specs=pl.BlockSpec((tm, tn), lambda j, i: (i, j)),
        compiler_params=pltpu.CompilerParams(
            dimension_semantics=("parallel", "parallel"),
            vmem_limit_bytes=48 * 1024 * 1024,  # fits v7x's 64 MiB physical VMEM
        ),
        cost_estimate=pl.CostEstimate(
            flops=flops,
            transcendentals=transcendentals,
            bytes_accessed=bytes_accessed,
        ),
    )(x1, x2, packed["w1_pack"], packed["w2_pack"], packed["b_pack"])

    # Strip batch / hidden padding (lane-dense inside the kernel; slice here).
    return out[:B, :hidden]


# ---------------------------------------------------------------------------
# Parameter init (matches torch nn.Linear uniform init; the gate Linear on
# cat([x1,x2]) is split into wg1 (acts on x1) and wg2 (acts on x2)).
# ---------------------------------------------------------------------------
def init_params(key, in_dim, hidden_dim):
    ks = jax.random.split(key, 7)
    scale1 = 1.0 / jnp.sqrt(in_dim)
    scaleg = 1.0 / jnp.sqrt(2 * in_dim)
    return {
        "w1":  jax.random.uniform(ks[0], (in_dim, hidden_dim), jnp.float32, -scale1, scale1),
        "b1":  jax.random.uniform(ks[1], (1, hidden_dim),      jnp.float32, -scale1, scale1),
        "w2":  jax.random.uniform(ks[2], (in_dim, hidden_dim), jnp.float32, -scale1, scale1),
        "b2":  jax.random.uniform(ks[3], (1, hidden_dim),      jnp.float32, -scale1, scale1),
        "wg1": jax.random.uniform(ks[4], (in_dim, hidden_dim), jnp.float32, -scaleg, scaleg),
        "wg2": jax.random.uniform(ks[5], (in_dim, hidden_dim), jnp.float32, -scaleg, scaleg),
        "bg":  jax.random.uniform(ks[6], (1, hidden_dim),      jnp.float32, -scaleg, scaleg),
    }


def gmu_reference(x1, x2, p):
    h1 = jnp.tanh(x1 @ p["w1"] + p["b1"])
    h2 = jnp.tanh(x2 @ p["w2"] + p["b2"])
    g = jax.nn.sigmoid(x1 @ p["wg1"] + x2 @ p["wg2"] + p["bg"])
    return g * h1 + (1.0 - g) * h2


if __name__ == "__main__":
    B, in_dim, hidden_dim = 8, 16, 32
    key = jax.random.PRNGKey(0)
    k1, k2, kp = jax.random.split(key, 3)

    x1 = jax.random.normal(k1, (B, in_dim), jnp.float32)
    x2 = jax.random.normal(k2, (B, in_dim), jnp.float32)
    params = init_params(kp, in_dim, hidden_dim)

    # Pack once (host/wrapper side). Use matmul_dtype=jnp.bfloat16 on v6e/v7x
    # for 2x MXU throughput and half the weight HBM bytes; kept f32 here so
    # the f32 reference check stays tight.
    packed = pack_params(params, tn=128, matmul_dtype=jnp.float32)

    out = gmu_forward(x1, x2, packed)
    jax.block_until_ready(out)

    ref = gmu_reference(x1, x2, params)
    assert out.shape == (B, hidden_dim)
    assert jnp.allclose(out, ref, atol=1e-5, rtol=1e-5)

    print("KERNEL_OK")
</pallas_src>

<mosaic_0001>
module attributes {stable_mosaic.version = 11 : i64} {
  func.func @gmu_kernel(%arg0: i32, %arg1: i32, %arg2: memref<8x16xf32, #tpu.memory_space<vmem>>, %arg3: memref<8x16xf32, #tpu.memory_space<vmem>>, %arg4: memref<16x256xf32, #tpu.memory_space<vmem>>, %arg5: memref<16x256xf32, #tpu.memory_space<vmem>>, %arg6: memref<1x384xf32, #tpu.memory_space<vmem>>, %arg7: memref<8x128xf32, #tpu.memory_space<vmem>>) attributes {dimension_semantics = [#tpu.dimension_semantics<parallel>, #tpu.dimension_semantics<parallel>], iteration_bounds = array<i64: 1, 1>, scalar_prefetch = 0 : i64, scratch_operands = 0 : i64, tpu.core_type = #tpu.core_type<tc>, window_params = [{transform_indices = @transform_0, window_bounds = array<i64: 8, 16>}, {transform_indices = @transform_1, window_bounds = array<i64: 8, 16>}, {transform_indices = @transform_2, window_bounds = array<i64: 16, 256>}, {transform_indices = @transform_3, window_bounds = array<i64: 16, 256>}, {transform_indices = @transform_4, window_bounds = array<i64: 1, 384>}, {transform_indices = @transform_5, window_bounds = array<i64: 8, 128>}]} {
    %c0 = arith.constant 0 : index
    %c0_0 = arith.constant 0 : index
    %0 = vector.load %arg2[%c0, %c0_0] : memref<8x16xf32, #tpu.memory_space<vmem>>, vector<8x16xf32>
    %c0_1 = arith.constant 0 : index
    %c0_2 = arith.constant 0 : index
    %1 = vector.load %arg4[%c0_1, %c0_2] : memref<16x256xf32, #tpu.memory_space<vmem>>, vector<16x256xf32>
    %cst = arith.constant dense<0.000000e+00> : vector<8x256xf32>
    %2 = tpu.matmul %0, %1, %cst {dimension_numbers = #tpu.dot_dimension_numbers<[1], [0], [0], [1], [0, 0, 1, 1], [], []>} : vector<8x16xf32>, vector<16x256xf32>, vector<8x256xf32> -> vector<8x256xf32>
    %c0_3 = arith.constant 0 : index
    %c0_4 = arith.constant 0 : index
    %3 = vector.load %arg3[%c0_3, %c0_4] : memref<8x16xf32, #tpu.memory_space<vmem>>, vector<8x16xf32>
    %c0_5 = arith.constant 0 : index
    %c0_6 = arith.constant 0 : index
    %4 = vector.load %arg5[%c0_5, %c0_6] : memref<16x256xf32, #tpu.memory_space<vmem>>, vector<16x256xf32>
    %cst_7 = arith.constant dense<0.000000e+00> : vector<8x256xf32>
    %5 = tpu.matmul %3, %4, %cst_7 {dimension_numbers = #tpu.dot_dimension_numbers<[1], [0], [0], [1], [0, 0, 1, 1], [], []>} : vector<8x16xf32>, vector<16x256xf32>, vector<8x256xf32> -> vector<8x256xf32>
    %6 = vector.extract_strided_slice %2 {offsets = [0, 0], sizes = [8, 128], strides = [1, 1]} : vector<8x256xf32> to vector<8x128xf32>
    %c0_8 = arith.constant 0 : index
    %c0_9 = arith.constant 0 : index
    %7 = vector.load %arg6[%c0_8, %c0_9] : memref<1x384xf32, #tpu.memory_space<vmem>>, vector<1x128xf32>
    %8 = vector.broadcast %7 : vector<1x128xf32> to vector<8x128xf32>
    %9 = arith.addf %6, %8 : vector<8x128xf32>
    %10 = math.tanh %9 : vector<8x128xf32>
    %11 = vector.extract_strided_slice %5 {offsets = [0, 0], sizes = [8, 128], strides = [1, 1]} : vector<8x256xf32> to vector<8x128xf32>
    %c0_10 = arith.constant 0 : index
    %c128 = arith.constant 128 : index
    %12 = vector.load %arg6[%c0_10, %c128] : memref<1x384xf32, #tpu.memory_space<vmem>>, vector<1x128xf32>
    %13 = vector.broadcast %12 : vector<1x128xf32> to vector<8x128xf32>
    %14 = arith.addf %11, %13 : vector<8x128xf32>
    %15 = math.tanh %14 : vector<8x128xf32>
    %16 = vector.extract_strided_slice %2 {offsets = [0, 128], sizes = [8, 128], strides = [1, 1]} : vector<8x256xf32> to vector<8x128xf32>
    %17 = vector.extract_strided_slice %5 {offsets = [0, 128], sizes = [8, 128], strides = [1, 1]} : vector<8x256xf32> to vector<8x128xf32>
    %18 = arith.addf %16, %17 : vector<8x128xf32>
    %c0_11 = arith.constant 0 : index
    %c256 = arith.constant 256 : index
    %19 = vector.load %arg6[%c0_11, %c256] : memref<1x384xf32, #tpu.memory_space<vmem>>, vector<1x128xf32>
    %20 = vector.broadcast %19 : vector<1x128xf32> to vector<8x128xf32>
    %21 = arith.addf %18, %20 : vector<8x128xf32>
    %cst_12 = arith.constant 5.000000e-01 : f32
    %22 = vector.broadcast %cst_12 : f32 to vector<8x128xf32>
    %23 = arith.mulf %22, %21 : vector<8x128xf32>
    %24 = math.tanh %23 : vector<8x128xf32>
    %cst_13 = arith.constant 5.000000e-01 : f32
    %25 = vector.broadcast %cst_13 : f32 to vector<8x128xf32>
    %26 = arith.mulf %25, %24 : vector<8x128xf32>
    %cst_14 = arith.constant 5.000000e-01 : f32
    %27 = vector.broadcast %cst_14 : f32 to vector<8x128xf32>
    %28 = arith.addf %26, %27 : vector<8x128xf32>
    %29 = arith.subf %10, %15 : vector<8x128xf32>
    %30 = arith.mulf %28, %29 : vector<8x128xf32>
    %31 = arith.addf %15, %30 : vector<8x128xf32>
    %c0_15 = arith.constant 0 : index
    %c0_16 = arith.constant 0 : index
    %32 = vector.load %arg7[%c0_15, %c0_16] : memref<8x128xf32, #tpu.memory_space<vmem>>, vector<8x128xf32>
    tpu.vector_store %arg7[%c0_15, %c0_16], %31 {strides = array<i32>} : memref<8x128xf32, #tpu.memory_space<vmem>>, vector<8x128xf32>,
    return
  }
  func.func @transform_0(%arg0: i32, %arg1: i32) -> (i32, i32) {
    %c0_i32 = arith.constant 0 : i32
    %c0_i32_0 = arith.constant 0 : i32
    return %arg1, %c0_i32 : i32, i32
  }
  func.func @transform_1(%arg0: i32, %arg1: i32) -> (i32, i32) {
    %c0_i32 = arith.constant 0 : i32
    %c0_i32_0 = arith.constant 0 : i32
    return %arg1, %c0_i32 : i32, i32
  }
  func.func @transform_2(%arg0: i32, %arg1: i32) -> (i32, i32) {
    %c0_i32 = arith.constant 0 : i32
    %c0_i32_0 = arith.constant 0 : i32
    return %c0_i32, %arg0 : i32, i32
  }
  func.func @transform_3(%arg0: i32, %arg1: i32) -> (i32, i32) {
    %c0_i32 = arith.constant 0 : i32
    %c0_i32_0 = arith.constant 0 : i32
    return %c0_i32, %arg0 : i32, i32
  }
  func.func @transform_4(%arg0: i32, %arg1: i32) -> (i32, i32) {
    %c0_i32 = arith.constant 0 : i32
    %c0_i32_0 = arith.constant 0 : i32
    return %c0_i32, %arg0 : i32, i32
  }
  func.func @transform_5(%arg0: i32, %arg1: i32) -> (i32, i32) {
    %c0_i32 = arith.constant 0 : i32
    return %arg1, %arg0 : i32, i32
  }
}

</mosaic_0001>

<llo_original>
// kernel: tpu_custom_call.1
$region0: #{tpu_custom_call.1}
  #allocation0 [shape = 'u32[]', space=smem, size = 0x4, offset = 0x4, fixed_abs, tag = 'smem constant byte address 0x4 - core index']
  #allocation1 [shape = 'u32[144,128]{1,0:T(1,128)}', space=vmem, size = 0x12000, scoped, tag = 'internal scratch']
  %s0 = inlined_call_operand.hbm [shape: f32[8,16], index: 0, kind: input, shape index: {}]
  %s1 = inlined_call_operand.hbm [shape: f32[8,16], index: 1, kind: input, shape index: {}]
  %s2 = inlined_call_operand.hbm [shape: f32[16,256], index: 2, kind: input, shape index: {}]
  %s3 = inlined_call_operand.hbm [shape: f32[16,256], index: 3, kind: input, shape index: {}]
  %s4 = inlined_call_operand.vmem [shape: f32[1,384], index: 4, kind: input, shape index: {}]
  %s5 = inlined_call_operand.hbm [shape: f32[8,128], index: 5, kind: output, shape index: {}]
  %s6 = sld [smem:[#allocation0]]
  $region46: #{tpu_custom_call.1} parent=0
    _
  %s8 = ssub.s32 1, %s6
  %s9 = scalar_select 0, %s8, %s6
  $region1: #{tpu_custom_call.1} parent=0
    #allocation2 [shape = 'u8[4096]{0}', space=vmem, size = 0x1000, scoped, tag = 'input window, operand 0, single buffered']
    #allocation3 [shape = 's32[1]{0}', space=sflag, size = 0x4, scoped, tag = 'scoped memory for tpu_custom_call.1']
    #allocation4 [shape = 's32[1]{0}', space=sflag, size = 0x4, scoped, tag = 'scoped memory for tpu_custom_call.1']
    #allocation5 [shape = 'u8[4096]{0}', space=vmem, size = 0x1000, scoped, tag = 'input window, operand 1, single buffered']
    #allocation6 [shape = 's32[1]{0}', space=sflag, size = 0x4, scoped, tag = 'scoped memory for tpu_custom_call.1']
    #allocation7 [shape = 'u8[16384]{0}', space=vmem, size = 0x4000, scoped, tag = 'input window, operand 2, single buffered']
    #allocation8 [shape = 'u8[16384]{0}', space=vmem, size = 0x4000, scoped, tag = 'input window, operand 3, single buffered']
    #allocation9 [shape = 's32[1]{0}', space=sflag, size = 0x4, scoped, tag = 'scoped memory for tpu_custom_call.1']
    #allocation10 [shape = 'u8[4096]{0}', space=vmem, size = 0x1000, scoped, tag = 'output window, operand 0, single buffered']
    %10 = vsyncpa [#allocation3], 0
    %11 = vsyncpa [#allocation6], 0
    %12 = vsyncpa [#allocation9], 0
    %13 = vsyncpa [#allocation4], 0
    // Predicated region
    $region2: #{tpu_custom_call.1} parent=1 // pred_check
      _
    $region3: #{tpu_custom_call.1} parent=1 // pred_check_branch
      %15 = sbr.rel (0) target = $region5
    $region4: #{tpu_custom_call.1} parent=1 // pred_region
      %s17 = ssub.s32 128, 128
      %18 = vsyncadd [#allocation3], %s17
      %s20 = sshll.u32 [#allocation2], 4
      %s21 = int_to_ptr.vmem [resolvable:$true] %s20
      %23 = dma.hbm_to_vmem [thread:$0]  %s0, 128, %s21, [#allocation3]
    $region5: #{tpu_custom_call.1} parent=1 // pred_fallthru
      _
    // Predicated region
    $region6: #{tpu_custom_call.1} parent=1 // pred_check
      _
    $region7: #{tpu_custom_call.1} parent=1 // pred_check_branch
      %25 = sbr.rel (0) target = $region9
    $region8: #{tpu_custom_call.1} parent=1 // pred_region
      %s27 = ssub.s32 128, 128
      %28 = vsyncadd [#allocation6], %s27
      %s30 = sshll.u32 [#allocation5], 4
      %s31 = int_to_ptr.vmem [resolvable:$true] %s30
      %33 = dma.hbm_to_vmem [thread:$0]  %s1, 128, %s31, [#allocation6]
    $region9: #{tpu_custom_call.1} parent=1 // pred_fallthru
      _
    // Predicated region
    $region10: #{tpu_custom_call.1} parent=1 // pred_check
      _
    $region11: #{tpu_custom_call.1} parent=1 // pred_check_branch
      %35 = sbr.rel (0) target = $region13
    $region12: #{tpu_custom_call.1} parent=1 // pred_region
      %s37 = ssub.s32 512, 512
      %38 = vsyncadd [#allocation6], %s37
      %s39 = sshll.u32 [#allocation7], 4
      %s40 = int_to_ptr.vmem [resolvable:$true] %s39
      %45 = dma.hbm_to_vmem [thread:$0]  %s2, 512, %s40, [#allocation6], 256, 256, 16
    $region13: #{tpu_custom_call.1} parent=1 // pred_fallthru
      _
    // Predicated region
    $region14: #{tpu_custom_call.1} parent=1 // pred_check
      _
    $region15: #{tpu_custom_call.1} parent=1 // pred_check_branch
      %47 = sbr.rel (0) target = $region17
    $region16: #{tpu_custom_call.1} parent=1 // pred_region
      %s49 = ssub.s32 512, 512
      %50 = vsyncadd [#allocation9], %s49
      %s51 = sshll.u32 [#allocation8], 4
      %s52 = int_to_ptr.vmem [resolvable:$true] %s51
      %57 = dma.hbm_to_vmem [thread:$0]  %s3, 512, %s52, [#allocation9], 256, 256, 16
    $region17: #{tpu_custom_call.1} parent=1 // pred_fallthru
      _
    // Predicated region
    $region18: #{tpu_custom_call.1} parent=1 // pred_check
      _
    $region19: #{tpu_custom_call.1} parent=1 // pred_check_branch
      %59 = sbr.rel (0) target = $region21
    $region20: #{tpu_custom_call.1} parent=1 // pred_region
      _
    $region21: #{tpu_custom_call.1} parent=1 // pred_fallthru
      _
    // Predicated region
    $region22: #{tpu_custom_call.1} parent=1 // pred_check
      _
    $region23: #{tpu_custom_call.1} parent=1 // pred_check_branch
      %61 = sbr.rel (0) target = $region25
    $region24: #{tpu_custom_call.1} parent=1 // pred_region
      %62 = dma.done [#allocation3], 128
    $region25: #{tpu_custom_call.1} parent=1 // pred_fallthru
      _
    // Predicated region
    $region26: #{tpu_custom_call.1} parent=1 // pred_check
      _
    $region27: #{tpu_custom_call.1} parent=1 // pred_check_branch
      %64 = sbr.rel (0) target = $region29
    $region28: #{tpu_custom_call.1} parent=1 // pred_region
      %65 = dma.done [#allocation6], 128
    $region29: #{tpu_custom_call.1} parent=1 // pred_fallthru
      _
    // Predicated region
    $region30: #{tpu_custom_call.1} parent=1 // pred_check
      _
    $region31: #{tpu_custom_call.1} parent=1 // pred_check_branch
      %67 = sbr.rel (0) target = $region33
    $region32: #{tpu_custom_call.1} parent=1 // pred_region
      %68 = dma.done [#allocation6], 512
    $region33: #{tpu_custom_call.1} parent=1 // pred_fallthru
      _
    // Predicated region
    $region34: #{tpu_custom_call.1} parent=1 // pred_check
      _
    $region35: #{tpu_custom_call.1} parent=1 // pred_check_branch
      %70 = sbr.rel (0) target = $region37
    $region36: #{tpu_custom_call.1} parent=1 // pred_region
      %71 = dma.done [#allocation9], 512
    $region37: #{tpu_custom_call.1} parent=1 // pred_fallthru
      _
    %v72 = vld [vmem:[#allocation2] sm:$0xff]
    %v73 = vld [vmem:[#allocation7] sm:$0xff]
    %v74 = vld [vmem:[#allocation7 + $0x8] sm:$0xff]
    %v75 = vld [vmem:[#allocation7 + $0x10] sm:$0xff]
    %v76 = vld [vmem:[#allocation7 + $0x18] sm:$0xff]
    %vm77 = vcmask 130048
    %v79 = vsel %vm77, %v72, 0
    %81 = vmatprep.subr.mxu0 %v74
    %82 = vmatpush1.msra.mxu0 %v73
    %83 = vmatprep.subr.mxu0 %v76
    %84 = vmatpush1.msra.mxu0 %v75
    %85 = vmatprep.subr.mxu0 0.0
    %86 = vmatpush1.msra.mxu0 0.0
    %87 = vmatprep.subr.mxu0 0.0
    %88 = vmatpush1.msra.mxu0 0.0
    %89 = vmatprep.subr.mxu0 0.0
    %90 = vmatpush1.msra.mxu0 0.0
    %91 = vmatprep.subr.mxu0 0.0
    %92 = vmatpush1.msra.mxu0 0.0
    %93 = vmatprep.subr.mxu0 0.0
    %94 = vmatpush1.msra.mxu0 0.0
    %95 = vmatprep.subr.mxu0 0.0
    %96 = vmatpush1.msra.mxu0 0.0
    %97 = vmatprep.subr.mxu0 0.0
    %98 = vmatpush1.msra.mxu0 0.0
    %99 = vmatprep.subr.mxu0 0.0
    %100 = vmatpush1.msra.mxu0 0.0
    %101 = vmatprep.subr.mxu0 0.0
    %102 = vmatpush1.msra.mxu0 0.0
    %103 = vmatprep.subr.mxu0 0.0
    %104 = vmatpush1.msra.mxu0 0.0
    %105 = vmatprep.subr.mxu0 0.0
    %106 = vmatpush1.msra.mxu0 0.0
    %107 = vmatprep.subr.mxu0 0.0
    %108 = vmatpush1.msra.mxu0 0.0
    %109 = vmatprep.subr.mxu0 0.0
    %110 = vmatpush1.msra.mxu0 0.0
    %111 = vmatprep.subr.mxu0 0.0
    %112 = vmatpush1.msra.mxu0 0.0
    %113 = vmatprep.subr.mxu0 0.0
    %114 = vmatpush1.msra.mxu0 0.0
    %115 = vmatprep.subr.mxu0 0.0
    %116 = vmatpush1.msra.mxu0 0.0
    %117 = vmatprep.subr.mxu0 0.0
    %118 = vmatpush1.msra.mxu0 0.0
    %119 = vmatprep.subr.mxu0 0.0
    %120 = vmatpush1.msra.mxu0 0.0
    %121 = vmatprep.subr.mxu0 0.0
    %122 = vmatpush1.msra.mxu0 0.0
    %123 = vmatprep.subr.mxu0 0.0
    %124 = vmatpush1.msra.mxu0 0.0
    %125 = vmatprep.subr.mxu0 0.0
    %126 = vmatpush1.msra.mxu0 0.0
    %127 = vmatprep.subr.mxu0 0.0
    %128 = vmatpush1.msra.mxu0 0.0
    %129 = vmatprep.subr.mxu0 0.0
    %130 = vmatpush1.msra.mxu0 0.0
    %131 = vmatprep.subr.mxu0 0.0
    %132 = vmatpush1.msra.mxu0 0.0
    %133 = vmatprep.subr.mxu0 0.0
    %134 = vmatpush1.msra.mxu0 0.0
    %135 = vmatprep.subr.mxu0 0.0
    %136 = vmatpush1.msra.mxu0 0.0
    %137 = vmatprep.subr.mxu0 0.0
    %138 = vmatpush1.msra.mxu0 0.0
    %139 = vmatprep.subr.mxu0 0.0
    %140 = vmatpush1.msra.mxu0 0.0
    %141 = vmatprep.subr.mxu0 0.0
    %142 = vmatpush1.msra.mxu0 0.0
    %143 = vmatprep.subr.mxu0 0.0
    %144 = vmatpush1.msra.mxu0 0.0
    %145 = vmatprep.mubr.f32.mxu0 0.0
    %146 = vmatmul.mubr.f32.gmra.mrb[0].mxu0 %v79
    %v147 = vpop.f32.mrb[0].mxu0
    %v148 = vadd.f32 0.0, %v147
    %v149 = vpop.f32.mrb[0].mxu0
    %v150 = vadd.f32 0.0, %v149
    %151 = vdwg.mxu0
    %v152 = vld [vmem:[#allocation5] sm:$0xff]
    %v153 = vld [vmem:[#allocation8] sm:$0xff]
    %v154 = vld [vmem:[#allocation8 + $0x8] sm:$0xff]
    %v155 = vld [vmem:[#allocation8 + $0x10] sm:$0xff]
    %v156 = vld [vmem:[#allocation8 + $0x18] sm:$0xff]
    %v158 = vsel %vm77, %v152, 0
    %160 = vmatprep.subr.mxu0 %v154
    %161 = vmatpush1.msra.mxu0 %v153
    %162 = vmatprep.subr.mxu0 %v156
    %163 = vmatpush1.msra.mxu0 %v155
    %164 = vmatprep.subr.mxu0 0.0
    %165 = vmatpush1.msra.mxu0 0.0
    %166 = vmatprep.subr.mxu0 0.0
    %167 = vmatpush1.msra.mxu0 0.0
    %168 = vmatprep.subr.mxu0 0.0
    %169 = vmatpush1.msra.mxu0 0.0
    %170 = vmatprep.subr.mxu0 0.0
    %171 = vmatpush1.msra.mxu0 0.0
    %172 = vmatprep.subr.mxu0 0.0
    %173 = vmatpush1.msra.mxu0 0.0
    %174 = vmatprep.subr.mxu0 0.0
    %175 = vmatpush1.msra.mxu0 0.0
    %176 = vmatprep.subr.mxu0 0.0
    %177 = vmatpush1.msra.mxu0 0.0
    %178 = vmatprep.subr.mxu0 0.0
    %179 = vmatpush1.msra.mxu0 0.0
    %180 = vmatprep.subr.mxu0 0.0
    %181 = vmatpush1.msra.mxu0 0.0
    %182 = vmatprep.subr.mxu0 0.0
    %183 = vmatpush1.msra.mxu0 0.0
    %184 = vmatprep.subr.mxu0 0.0
    %185 = vmatpush1.msra.mxu0 0.0
    %186 = vmatprep.subr.mxu0 0.0
    %187 = vmatpush1.msra.mxu0 0.0
    %188 = vmatprep.subr.mxu0 0.0
    %189 = vmatpush1.msra.mxu0 0.0
    %190 = vmatprep.subr.mxu0 0.0
    %191 = vmatpush1.msra.mxu0 0.0
    %192 = vmatprep.subr.mxu0 0.0
    %193 = vmatpush1.msra.mxu0 0.0
    %194 = vmatprep.subr.mxu0 0.0
    %195 = vmatpush1.msra.mxu0 0.0
    %196 = vmatprep.subr.mxu0 0.0
    %197 = vmatpush1.msra.mxu0 0.0
    %198 = vmatprep.subr.mxu0 0.0
    %199 = vmatpush1.msra.mxu0 0.0
    %200 = vmatprep.subr.mxu0 0.0
    %201 = vmatpush1.msra.mxu0 0.0
    %202 = vmatprep.subr.mxu0 0.0
    %203 = vmatpush1.msra.mxu0 0.0
    %204 = vmatprep.subr.mxu0 0.0
    %205 = vmatpush1.msra.mxu0 0.0
    %206 = vmatprep.subr.mxu0 0.0
    %207 = vmatpush1.msra.mxu0 0.0
    %208 = vmatprep.subr.mxu0 0.0
    %209 = vmatpush1.msra.mxu0 0.0
    %210 = vmatprep.subr.mxu0 0.0
    %211 = vmatpush1.msra.mxu0 0.0
    %212 = vmatprep.subr.mxu0 0.0
    %213 = vmatpush1.msra.mxu0 0.0
    %214 = vmatprep.subr.mxu0 0.0
    %215 = vmatpush1.msra.mxu0 0.0
    %216 = vmatprep.subr.mxu0 0.0
    %217 = vmatpush1.msra.mxu0 0.0
    %218 = vmatprep.subr.mxu0 0.0
    %219 = vmatpush1.msra.mxu0 0.0
    %220 = vmatprep.subr.mxu0 0.0
    %221 = vmatpush1.msra.mxu0 0.0
    %222 = vmatprep.subr.mxu0 0.0
    %223 = vmatpush1.msra.mxu0 0.0
    %224 = vmatprep.mubr.f32.mxu0 0.0
    %225 = vmatmul.mubr.f32.gmra.mrb[0].mxu0 %v158
    %v226 = vpop.f32.mrb[0].mxu0
    %v227 = vadd.f32 0.0, %v226
    %v228 = vpop.f32.mrb[0].mxu0
    %v229 = vadd.f32 0.0, %v228
    %230 = vdwg.mxu0
    %v231 = vld [vmem:[%s4] sm:$0x1]
    %v233 = vlaneseq
    %v234 = vshrl.u32 %v233, 7
    %v235 = vsub.s32 0, %v234
    %v236 = vrot.slane %v231, %v235
    %v238 = vadd.f32 %v148, %v236
    %v239 = vtanh.pop %v238
    %v240 = vld [vmem:[%s4 + $0x1] sm:$0x1]
    %v242 = vlaneseq
    %v243 = vshrl.u32 %v242, 7
    %v244 = vsub.s32 0, %v243
    %v245 = vrot.slane %v240, %v244
    %v247 = vadd.f32 %v227, %v245
    %v248 = vtanh.pop %v247
    %v249 = vadd.f32 %v150, %v229
    %v250 = vld [vmem:[%s4 + $0x2] sm:$0x1]
    %v252 = vlaneseq
    %v253 = vshrl.u32 %v252, 7
    %v254 = vsub.s32 0, %v253
    %v255 = vrot.slane %v250, %v254
    %v257 = vadd.f32 %v249, %v255
    %v258 = vmul.f32 %v257, 0.5
    %v259 = vtanh.pop %v258
    %v260 = vmul.f32 %v259, 0.5
    %v261 = vadd.f32 %v260, 0.5
    %v262 = vsub.f32 %v239, %v248
    %v263 = vmul.f32 %v261, %v262
    %v264 = vadd.f32 %v248, %v263
    %265 = vst [vmem:[#allocation10] sm:$0xff] %v264
    // Predicated region
    $region38: #{tpu_custom_call.1} parent=1 // pred_check
      _
    $region39: #{tpu_custom_call.1} parent=1 // pred_check_branch
      %267 = sbr.rel (0) target = $region41
    $region40: #{tpu_custom_call.1} parent=1 // pred_region
      %s269 = ssub.s32 128, 128
      %270 = vsyncadd [#allocation4], %s269
      %s272 = sshll.u32 [#allocation10], 4
      %s273 = int_to_ptr.vmem [resolvable:$true] %s272
      %275 = dma.vmem_to_hbm [thread:$0]  %s273, 128, %s5, [#allocation4]
    $region41: #{tpu_custom_call.1} parent=1 // pred_fallthru
      _
    // Predicated region
    $region42: #{tpu_custom_call.1} parent=1 // pred_check
      _
    $region43: #{tpu_custom_call.1} parent=1 // pred_check_branch
      %277 = sbr.rel (0) target = $region45
    $region44: #{tpu_custom_call.1} parent=1 // pred_region
      %278 = dma.done [#allocation4], 128
    $region45: #{tpu_custom_call.1} parent=1 // pred_fallthru
      _
    %279 = vsyncpa [#allocation3], 1
    %280 = vsyncpa [#allocation6], 1
    %281 = vsyncpa [#allocation9], 1
    %282 = vsyncpa [#allocation4], 1

</llo_original>
